<compile_context>
chip_gen: v5e
topology: v5e:2x2
jax: 0.10.0
libtpu: 0.0.40
codegen_flags: <defaults>
</compile_context>

<pallas_src>
import jax
import jax.numpy as jnp
from jax.experimental import pallas as pl
from jax.experimental.pallas import tpu as pltpu


def _lstm_kernel(x_ref, wih_ref, whh_ref, b_ref, out_ref):
    """Whole-sequence LSTM forward in one kernel invocation (no grid).

    x_ref   : [L*B, C]   time-major inputs
    wih_ref : [C, 4H]    pre-scaled input weights
    whh_ref : [H, 4H]    pre-scaled recurrent weights
    b_ref   : [1, 4H]    pre-scaled folded bias
    out_ref : [B, (L+1)*H]  columns [t*H:(t+1)*H] = h_t, last H columns = c_n
    """
    LB, _ = x_ref.shape
    H = whh_ref.shape[0]
    G = 4 * H
    B = out_ref.shape[0]
    L = LB // B

    x = x_ref[...].astype(jnp.float32)            # [L*B, C]
    wih = wih_ref[...]                            # [C, 4H]
    whh = whh_ref[...]                            # [H, 4H]
    bias = b_ref[...]                             # [1, 4H]

    # --- Hoisted input projection: one MXU matmul for ALL timesteps. ---
    gx = jnp.dot(x, wih, preferred_element_type=jnp.float32) + bias   # [L*B, 4H]
    gx = gx.reshape(L, B, G)                      # time-major: gx[t] is a free pick

    # Per-column affine fix-up turning the single tanh into sigmoid on the
    # i/f/o columns (PyTorch gate order i, f, g, o).  Built once, hoisted.
    col = jax.lax.broadcasted_iota(jnp.int32, (1, G), 1)
    is_g = jnp.logical_and(col >= 2 * H, col < 3 * H)                 # [1, 4H]
    post_scale = jnp.where(is_g, 1.0, 0.5).astype(jnp.float32)        # [1, 4H]
    post_bias = jnp.where(is_g, 0.0, 0.5).astype(jnp.float32)         # [1, 4H]

    h = jnp.zeros((B, H), jnp.float32)
    c = jnp.zeros((B, H), jnp.float32)
    hs = []

    # L is small and static -> fully unrolled serial recurrence.
    for t in range(L):
        # Per-step work: one recurrent MXU push + one tanh over full lane width.
        gates = gx[t] + jnp.dot(h, whh, preferred_element_type=jnp.float32)  # [B, 4H]
        act = jnp.tanh(gates) * post_scale + post_bias                       # [B, 4H]

        i_g = act[:, 0 * H:1 * H]
        f_g = act[:, 1 * H:2 * H]
        g_g = act[:, 2 * H:3 * H]
        o_g = act[:, 3 * H:4 * H]

        c = f_g * c + i_g * g_g
        h = o_g * jnp.tanh(c)
        hs.append(h)

    # Single lane-dense writeback: [B, (L+1)*H]; c folded into the same slab.
    out_ref[...] = jnp.concatenate(hs + [c], axis=-1).astype(out_ref.dtype)


def prepare_encoder_params(w_ih, w_hh, b_ih, b_hh):
    """One-time (amortized) weight prep, kept OUT of the per-call hot path.

    Transposes the weights to [K, 4H], folds the two biases, and pre-scales
    the sigmoid-gate columns by 0.5 so the kernel needs a single tanh per step.
    """
    H = w_hh.shape[1]
    G = 4 * H
    col = jnp.arange(G)
    is_g = jnp.logical_and(col >= 2 * H, col < 3 * H)
    pre_scale = jnp.where(is_g, 1.0, 0.5).astype(jnp.float32)         # [4H]

    wih_s = jnp.transpose(w_ih).astype(jnp.float32) * pre_scale[None, :]   # [C, 4H]
    whh_s = jnp.transpose(w_hh).astype(jnp.float32) * pre_scale[None, :]   # [H, 4H]
    bias_s = ((b_ih + b_hh).astype(jnp.float32) * pre_scale)[None, :]      # [1, 4H]
    return wih_s, whh_s, bias_s


@jax.jit
def encoder_forward(embedded_inputs, wih_s, whh_s, bias_s):
    """
    embedded_inputs: [B, L, C]
    wih_s/whh_s/bias_s: pre-prepared params (see prepare_encoder_params).
    Returns (outputs [B, L, H], (h_n [1, B, H], c_n [1, B, H])).
    """
    B, L, C = embedded_inputs.shape
    H = whh_s.shape[0]
    dtype = embedded_inputs.dtype

    # Time-major slab so the kernel's per-step gate read is a leading-axis pick.
    x_tm = jnp.transpose(embedded_inputs, (1, 0, 2)).reshape(L * B, C)

    vmem = pl.BlockSpec(memory_space=pltpu.MemorySpace.VMEM)
    out_slab = pl.pallas_call(
        _lstm_kernel,
        out_shape=jax.ShapeDtypeStruct((B, (L + 1) * H), jnp.float32),
        in_specs=[vmem, vmem, vmem, vmem],
        out_specs=vmem,
    )(x_tm, wih_s, whh_s, bias_s)

    outputs = out_slab[:, :L * H].reshape(B, L, H).astype(dtype)       # [B, L, H]
    c_n = out_slab[:, L * H:].astype(dtype)                            # [B, H]
    h_n = outputs[:, -1, :]                                            # [B, H]
    return outputs, (h_n[None], c_n[None])


def _reference_lstm(x, w_ih, w_hh, b_ih, b_hh):
    """Pure-JAX reference (lax.scan) matching torch.nn.LSTM semantics."""
    B, L, C = x.shape
    H = w_hh.shape[1]
    bias = b_ih + b_hh

    def step(carry, x_t):
        h, c = carry
        gates = x_t @ w_ih.T + h @ w_hh.T + bias
        i = jax.nn.sigmoid(gates[:, 0 * H:1 * H])
        f = jax.nn.sigmoid(gates[:, 1 * H:2 * H])
        g = jnp.tanh(gates[:, 2 * H:3 * H])
        o = jax.nn.sigmoid(gates[:, 3 * H:4 * H])
        c = f * c + i * g
        h = o * jnp.tanh(c)
        return (h, c), h

    init = (jnp.zeros((B, H), jnp.float32), jnp.zeros((B, H), jnp.float32))
    (h_n, c_n), outs = jax.lax.scan(step, init, jnp.transpose(x, (1, 0, 2)))
    return jnp.transpose(outs, (1, 0, 2)), (h_n[None], c_n[None])


if __name__ == "__main__":
    # Small shapes consistent with the module defaults.
    B, L, C, H = 2, 8, 8, 32

    key = jax.random.PRNGKey(0)
    kx, k1, k2, k3, k4 = jax.random.split(key, 5)

    # Deterministic parameter init (same shapes as nn.LSTM, uniform(-1/sqrt(H), 1/sqrt(H))).
    bound = 1.0 / jnp.sqrt(jnp.float32(H))
    w_ih = jax.random.uniform(k1, (4 * H, C), jnp.float32, -bound, bound)
    w_hh = jax.random.uniform(k2, (4 * H, H), jnp.float32, -bound, bound)
    b_ih = jax.random.uniform(k3, (4 * H,), jnp.float32, -bound, bound)
    b_hh = jax.random.uniform(k4, (4 * H,), jnp.float32, -bound, bound)

    x = jax.random.normal(kx, (B, L, C), jnp.float32)

    # One-time weight prep (amortized across calls), then the jitted forward.
    wih_s, whh_s, bias_s = prepare_encoder_params(w_ih, w_hh, b_ih, b_hh)
    wih_s, whh_s, bias_s = jax.block_until_ready((wih_s, whh_s, bias_s))

    outputs, (h_n, c_n) = encoder_forward(x, wih_s, whh_s, bias_s)
    jax.block_until_ready((outputs, h_n, c_n))

    ref_out, (ref_h, ref_c) = _reference_lstm(x, w_ih, w_hh, b_ih, b_hh)
    assert outputs.shape == (B, L, H)
    assert h_n.shape == (1, B, H) and c_n.shape == (1, B, H)
    assert jnp.allclose(outputs, ref_out, atol=1e-5, rtol=1e-5)
    assert jnp.allclose(h_n, ref_h, atol=1e-5, rtol=1e-5)
    assert jnp.allclose(c_n, ref_c, atol=1e-5, rtol=1e-5)

    print("KERNEL_OK")
</pallas_src>

<mosaic_0001>
module attributes {stable_mosaic.version = 11 : i64} {
  func.func @_lstm_kernel(%arg0: memref<16x8xf32, #tpu.memory_space<vmem>>, %arg1: memref<8x128xf32, #tpu.memory_space<vmem>>, %arg2: memref<32x128xf32, #tpu.memory_space<vmem>>, %arg3: memref<1x128xf32, #tpu.memory_space<vmem>>, %arg4: memref<2x288xf32, #tpu.memory_space<vmem>>) attributes {dimension_semantics = [], scalar_prefetch = 0 : i64, scratch_operands = 0 : i64, tpu.core_type = #tpu.core_type<tc>} {
    %c0 = arith.constant 0 : index
    %c0_0 = arith.constant 0 : index
    %0 = vector.load %arg0[%c0, %c0_0] : memref<16x8xf32, #tpu.memory_space<vmem>>, vector<16x8xf32>
    %c0_1 = arith.constant 0 : index
    %c0_2 = arith.constant 0 : index
    %1 = vector.load %arg1[%c0_1, %c0_2] : memref<8x128xf32, #tpu.memory_space<vmem>>, vector<8x128xf32>
    %c0_3 = arith.constant 0 : index
    %c0_4 = arith.constant 0 : index
    %2 = vector.load %arg2[%c0_3, %c0_4] : memref<32x128xf32, #tpu.memory_space<vmem>>, vector<32x128xf32>
    %c0_5 = arith.constant 0 : index
    %c0_6 = arith.constant 0 : index
    %3 = vector.load %arg3[%c0_5, %c0_6] : memref<1x128xf32, #tpu.memory_space<vmem>>, vector<1x128xf32>
    %cst = arith.constant dense<0.000000e+00> : vector<16x128xf32>
    %4 = tpu.matmul %0, %1, %cst {dimension_numbers = #tpu.dot_dimension_numbers<[1], [0], [0], [1], [0, 0, 1, 1], [], []>} : vector<16x8xf32>, vector<8x128xf32>, vector<16x128xf32> -> vector<16x128xf32>
    %5 = vector.broadcast %3 : vector<1x128xf32> to vector<16x128xf32>
    %6 = arith.addf %4, %5 : vector<16x128xf32>
    %7 = vector.shape_cast %6 : vector<16x128xf32> to vector<8x2x128xf32>
    %8 = tpu.iota {dimensions = array<i32: 1>} : vector<1x128xi32>
    %c64_i32 = arith.constant 64 : i32
    %9 = vector.broadcast %c64_i32 : i32 to vector<1x128xi32>
    %10 = arith.cmpi sge, %8, %9 : vector<1x128xi32>
    %c96_i32 = arith.constant 96 : i32
    %11 = vector.broadcast %c96_i32 : i32 to vector<1x128xi32>
    %12 = arith.cmpi slt, %8, %11 : vector<1x128xi32>
    %13 = arith.andi %10, %12 : vector<1x128xi1>
    %cst_7 = arith.constant 1.000000e+00 : f32
    %cst_8 = arith.constant 5.000000e-01 : f32
    %14 = vector.broadcast %cst_7 : f32 to vector<1x128xf32>
    %15 = vector.broadcast %cst_8 : f32 to vector<1x128xf32>
    %16 = arith.select %13, %14, %15 : vector<1x128xi1>, vector<1x128xf32>
    %cst_9 = arith.constant 0.000000e+00 : f32
    %cst_10 = arith.constant 5.000000e-01 : f32
    %17 = vector.broadcast %cst_9 : f32 to vector<1x128xf32>
    %18 = vector.broadcast %cst_10 : f32 to vector<1x128xf32>
    %19 = arith.select %13, %17, %18 : vector<1x128xi1>, vector<1x128xf32>
    %cst_11 = arith.constant 0.000000e+00 : f32
    %20 = vector.broadcast %cst_11 : f32 to vector<2x32xf32>
    %cst_12 = arith.constant 0.000000e+00 : f32
    %21 = vector.broadcast %cst_12 : f32 to vector<2x32xf32>
    %22 = vector.extract_strided_slice %7 {offsets = [0, 0, 0], sizes = [1, 2, 128], strides = [1, 1, 1]} : vector<8x2x128xf32> to vector<1x2x128xf32>
    %23 = vector.shape_cast %22 : vector<1x2x128xf32> to vector<2x128xf32>
    %cst_13 = arith.constant dense<0.000000e+00> : vector<2x128xf32>
    %24 = tpu.matmul %20, %2, %cst_13 {dimension_numbers = #tpu.dot_dimension_numbers<[1], [0], [0], [1], [0, 0, 1, 1], [], []>} : vector<2x32xf32>, vector<32x128xf32>, vector<2x128xf32> -> vector<2x128xf32>
    %25 = arith.addf %23, %24 : vector<2x128xf32>
    %26 = math.tanh %25 : vector<2x128xf32>
    %27 = vector.broadcast %16 : vector<1x128xf32> to vector<2x128xf32>
    %28 = arith.mulf %26, %27 : vector<2x128xf32>
    %29 = vector.broadcast %19 : vector<1x128xf32> to vector<2x128xf32>
    %30 = arith.addf %28, %29 : vector<2x128xf32>
    %31 = vector.extract_strided_slice %30 {offsets = [0, 0], sizes = [2, 32], strides = [1, 1]} : vector<2x128xf32> to vector<2x32xf32>
    %32 = vector.extract_strided_slice %30 {offsets = [0, 32], sizes = [2, 32], strides = [1, 1]} : vector<2x128xf32> to vector<2x32xf32>
    %33 = vector.extract_strided_slice %30 {offsets = [0, 64], sizes = [2, 32], strides = [1, 1]} : vector<2x128xf32> to vector<2x32xf32>
    %34 = vector.extract_strided_slice %30 {offsets = [0, 96], sizes = [2, 32], strides = [1, 1]} : vector<2x128xf32> to vector<2x32xf32>
    %35 = arith.mulf %32, %21 : vector<2x32xf32>
    %36 = arith.mulf %31, %33 : vector<2x32xf32>
    %37 = arith.addf %35, %36 : vector<2x32xf32>
    %38 = math.tanh %37 : vector<2x32xf32>
    %39 = arith.mulf %34, %38 : vector<2x32xf32>
    %40 = vector.extract_strided_slice %7 {offsets = [1, 0, 0], sizes = [1, 2, 128], strides = [1, 1, 1]} : vector<8x2x128xf32> to vector<1x2x128xf32>
    %41 = vector.shape_cast %40 : vector<1x2x128xf32> to vector<2x128xf32>
    %cst_14 = arith.constant dense<0.000000e+00> : vector<2x128xf32>
    %42 = tpu.matmul %39, %2, %cst_14 {dimension_numbers = #tpu.dot_dimension_numbers<[1], [0], [0], [1], [0, 0, 1, 1], [], []>} : vector<2x32xf32>, vector<32x128xf32>, vector<2x128xf32> -> vector<2x128xf32>
    %43 = arith.addf %41, %42 : vector<2x128xf32>
    %44 = math.tanh %43 : vector<2x128xf32>
    %45 = vector.broadcast %16 : vector<1x128xf32> to vector<2x128xf32>
    %46 = arith.mulf %44, %45 : vector<2x128xf32>
    %47 = vector.broadcast %19 : vector<1x128xf32> to vector<2x128xf32>
    %48 = arith.addf %46, %47 : vector<2x128xf32>
    %49 = vector.extract_strided_slice %48 {offsets = [0, 0], sizes = [2, 32], strides = [1, 1]} : vector<2x128xf32> to vector<2x32xf32>
    %50 = vector.extract_strided_slice %48 {offsets = [0, 32], sizes = [2, 32], strides = [1, 1]} : vector<2x128xf32> to vector<2x32xf32>
    %51 = vector.extract_strided_slice %48 {offsets = [0, 64], sizes = [2, 32], strides = [1, 1]} : vector<2x128xf32> to vector<2x32xf32>
    %52 = vector.extract_strided_slice %48 {offsets = [0, 96], sizes = [2, 32], strides = [1, 1]} : vector<2x128xf32> to vector<2x32xf32>
    %53 = arith.mulf %50, %37 : vector<2x32xf32>
    %54 = arith.mulf %49, %51 : vector<2x32xf32>
    %55 = arith.addf %53, %54 : vector<2x32xf32>
    %56 = math.tanh %55 : vector<2x32xf32>
    %57 = arith.mulf %52, %56 : vector<2x32xf32>
    %58 = vector.extract_strided_slice %7 {offsets = [2, 0, 0], sizes = [1, 2, 128], strides = [1, 1, 1]} : vector<8x2x128xf32> to vector<1x2x128xf32>
    %59 = vector.shape_cast %58 : vector<1x2x128xf32> to vector<2x128xf32>
    %cst_15 = arith.constant dense<0.000000e+00> : vector<2x128xf32>
    %60 = tpu.matmul %57, %2, %cst_15 {dimension_numbers = #tpu.dot_dimension_numbers<[1], [0], [0], [1], [0, 0, 1, 1], [], []>} : vector<2x32xf32>, vector<32x128xf32>, vector<2x128xf32> -> vector<2x128xf32>
    %61 = arith.addf %59, %60 : vector<2x128xf32>
    %62 = math.tanh %61 : vector<2x128xf32>
    %63 = vector.broadcast %16 : vector<1x128xf32> to vector<2x128xf32>
    %64 = arith.mulf %62, %63 : vector<2x128xf32>
    %65 = vector.broadcast %19 : vector<1x128xf32> to vector<2x128xf32>
    %66 = arith.addf %64, %65 : vector<2x128xf32>
    %67 = vector.extract_strided_slice %66 {offsets = [0, 0], sizes = [2, 32], strides = [1, 1]} : vector<2x128xf32> to vector<2x32xf32>
    %68 = vector.extract_strided_slice %66 {offsets = [0, 32], sizes = [2, 32], strides = [1, 1]} : vector<2x128xf32> to vector<2x32xf32>
    %69 = vector.extract_strided_slice %66 {offsets = [0, 64], sizes = [2, 32], strides = [1, 1]} : vector<2x128xf32> to vector<2x32xf32>
    %70 = vector.extract_strided_slice %66 {offsets = [0, 96], sizes = [2, 32], strides = [1, 1]} : vector<2x128xf32> to vector<2x32xf32>
    %71 = arith.mulf %68, %55 : vector<2x32xf32>
    %72 = arith.mulf %67, %69 : vector<2x32xf32>
    %73 = arith.addf %71, %72 : vector<2x32xf32>
    %74 = math.tanh %73 : vector<2x32xf32>
    %75 = arith.mulf %70, %74 : vector<2x32xf32>
    %76 = vector.extract_strided_slice %7 {offsets = [3, 0, 0], sizes = [1, 2, 128], strides = [1, 1, 1]} : vector<8x2x128xf32> to vector<1x2x128xf32>
    %77 = vector.shape_cast %76 : vector<1x2x128xf32> to vector<2x128xf32>
    %cst_16 = arith.constant dense<0.000000e+00> : vector<2x128xf32>
    %78 = tpu.matmul %75, %2, %cst_16 {dimension_numbers = #tpu.dot_dimension_numbers<[1], [0], [0], [1], [0, 0, 1, 1], [], []>} : vector<2x32xf32>, vector<32x128xf32>, vector<2x128xf32> -> vector<2x128xf32>
    %79 = arith.addf %77, %78 : vector<2x128xf32>
    %80 = math.tanh %79 : vector<2x128xf32>
    %81 = vector.broadcast %16 : vector<1x128xf32> to vector<2x128xf32>
    %82 = arith.mulf %80, %81 : vector<2x128xf32>
    %83 = vector.broadcast %19 : vector<1x128xf32> to vector<2x128xf32>
    %84 = arith.addf %82, %83 : vector<2x128xf32>
    %85 = vector.extract_strided_slice %84 {offsets = [0, 0], sizes = [2, 32], strides = [1, 1]} : vector<2x128xf32> to vector<2x32xf32>
    %86 = vector.extract_strided_slice %84 {offsets = [0, 32], sizes = [2, 32], strides = [1, 1]} : vector<2x128xf32> to vector<2x32xf32>
    %87 = vector.extract_strided_slice %84 {offsets = [0, 64], sizes = [2, 32], strides = [1, 1]} : vector<2x128xf32> to vector<2x32xf32>
    %88 = vector.extract_strided_slice %84 {offsets = [0, 96], sizes = [2, 32], strides = [1, 1]} : vector<2x128xf32> to vector<2x32xf32>
    %89 = arith.mulf %86, %73 : vector<2x32xf32>
    %90 = arith.mulf %85, %87 : vector<2x32xf32>
    %91 = arith.addf %89, %90 : vector<2x32xf32>
    %92 = math.tanh %91 : vector<2x32xf32>
    %93 = arith.mulf %88, %92 : vector<2x32xf32>
    %94 = vector.extract_strided_slice %7 {offsets = [4, 0, 0], sizes = [1, 2, 128], strides = [1, 1, 1]} : vector<8x2x128xf32> to vector<1x2x128xf32>
    %95 = vector.shape_cast %94 : vector<1x2x128xf32> to vector<2x128xf32>
    %cst_17 = arith.constant dense<0.000000e+00> : vector<2x128xf32>
    %96 = tpu.matmul %93, %2, %cst_17 {dimension_numbers = #tpu.dot_dimension_numbers<[1], [0], [0], [1], [0, 0, 1, 1], [], []>} : vector<2x32xf32>, vector<32x128xf32>, vector<2x128xf32> -> vector<2x128xf32>
    %97 = arith.addf %95, %96 : vector<2x128xf32>
    %98 = math.tanh %97 : vector<2x128xf32>
    %99 = vector.broadcast %16 : vector<1x128xf32> to vector<2x128xf32>
    %100 = arith.mulf %98, %99 : vector<2x128xf32>
    %101 = vector.broadcast %19 : vector<1x128xf32> to vector<2x128xf32>
    %102 = arith.addf %100, %101 : vector<2x128xf32>
    %103 = vector.extract_strided_slice %102 {offsets = [0, 0], sizes = [2, 32], strides = [1, 1]} : vector<2x128xf32> to vector<2x32xf32>
    %104 = vector.extract_strided_slice %102 {offsets = [0, 32], sizes = [2, 32], strides = [1, 1]} : vector<2x128xf32> to vector<2x32xf32>
    %105 = vector.extract_strided_slice %102 {offsets = [0, 64], sizes = [2, 32], strides = [1, 1]} : vector<2x128xf32> to vector<2x32xf32>
    %106 = vector.extract_strided_slice %102 {offsets = [0, 96], sizes = [2, 32], strides = [1, 1]} : vector<2x128xf32> to vector<2x32xf32>
    %107 = arith.mulf %104, %91 : vector<2x32xf32>
    %108 = arith.mulf %103, %105 : vector<2x32xf32>
    %109 = arith.addf %107, %108 : vector<2x32xf32>
    %110 = math.tanh %109 : vector<2x32xf32>
    %111 = arith.mulf %106, %110 : vector<2x32xf32>
    %112 = vector.extract_strided_slice %7 {offsets = [5, 0, 0], sizes = [1, 2, 128], strides = [1, 1, 1]} : vector<8x2x128xf32> to vector<1x2x128xf32>
    %113 = vector.shape_cast %112 : vector<1x2x128xf32> to vector<2x128xf32>
    %cst_18 = arith.constant dense<0.000000e+00> : vector<2x128xf32>
    %114 = tpu.matmul %111, %2, %cst_18 {dimension_numbers = #tpu.dot_dimension_numbers<[1], [0], [0], [1], [0, 0, 1, 1], [], []>} : vector<2x32xf32>, vector<32x128xf32>, vector<2x128xf32> -> vector<2x128xf32>
    %115 = arith.addf %113, %114 : vector<2x128xf32>
    %116 = math.tanh %115 : vector<2x128xf32>
    %117 = vector.broadcast %16 : vector<1x128xf32> to vector<2x128xf32>
    %118 = arith.mulf %116, %117 : vector<2x128xf32>
    %119 = vector.broadcast %19 : vector<1x128xf32> to vector<2x128xf32>
    %120 = arith.addf %118, %119 : vector<2x128xf32>
    %121 = vector.extract_strided_slice %120 {offsets = [0, 0], sizes = [2, 32], strides = [1, 1]} : vector<2x128xf32> to vector<2x32xf32>
    %122 = vector.extract_strided_slice %120 {offsets = [0, 32], sizes = [2, 32], strides = [1, 1]} : vector<2x128xf32> to vector<2x32xf32>
    %123 = vector.extract_strided_slice %120 {offsets = [0, 64], sizes = [2, 32], strides = [1, 1]} : vector<2x128xf32> to vector<2x32xf32>
    %124 = vector.extract_strided_slice %120 {offsets = [0, 96], sizes = [2, 32], strides = [1, 1]} : vector<2x128xf32> to vector<2x32xf32>
    %125 = arith.mulf %122, %109 : vector<2x32xf32>
    %126 = arith.mulf %121, %123 : vector<2x32xf32>
    %127 = arith.addf %125, %126 : vector<2x32xf32>
    %128 = math.tanh %127 : vector<2x32xf32>
    %129 = arith.mulf %124, %128 : vector<2x32xf32>
    %130 = vector.extract_strided_slice %7 {offsets = [6, 0, 0], sizes = [1, 2, 128], strides = [1, 1, 1]} : vector<8x2x128xf32> to vector<1x2x128xf32>
    %131 = vector.shape_cast %130 : vector<1x2x128xf32> to vector<2x128xf32>
    %cst_19 = arith.constant dense<0.000000e+00> : vector<2x128xf32>
    %132 = tpu.matmul %129, %2, %cst_19 {dimension_numbers = #tpu.dot_dimension_numbers<[1], [0], [0], [1], [0, 0, 1, 1], [], []>} : vector<2x32xf32>, vector<32x128xf32>, vector<2x128xf32> -> vector<2x128xf32>
    %133 = arith.addf %131, %132 : vector<2x128xf32>
    %134 = math.tanh %133 : vector<2x128xf32>
    %135 = vector.broadcast %16 : vector<1x128xf32> to vector<2x128xf32>
    %136 = arith.mulf %134, %135 : vector<2x128xf32>
    %137 = vector.broadcast %19 : vector<1x128xf32> to vector<2x128xf32>
    %138 = arith.addf %136, %137 : vector<2x128xf32>
    %139 = vector.extract_strided_slice %138 {offsets = [0, 0], sizes = [2, 32], strides = [1, 1]} : vector<2x128xf32> to vector<2x32xf32>
    %140 = vector.extract_strided_slice %138 {offsets = [0, 32], sizes = [2, 32], strides = [1, 1]} : vector<2x128xf32> to vector<2x32xf32>
    %141 = vector.extract_strided_slice %138 {offsets = [0, 64], sizes = [2, 32], strides = [1, 1]} : vector<2x128xf32> to vector<2x32xf32>
    %142 = vector.extract_strided_slice %138 {offsets = [0, 96], sizes = [2, 32], strides = [1, 1]} : vector<2x128xf32> to vector<2x32xf32>
    %143 = arith.mulf %140, %127 : vector<2x32xf32>
    %144 = arith.mulf %139, %141 : vector<2x32xf32>
    %145 = arith.addf %143, %144 : vector<2x32xf32>
    %146 = math.tanh %145 : vector<2x32xf32>
    %147 = arith.mulf %142, %146 : vector<2x32xf32>
    %148 = vector.extract_strided_slice %7 {offsets = [7, 0, 0], sizes = [1, 2, 128], strides = [1, 1, 1]} : vector<8x2x128xf32> to vector<1x2x128xf32>
    %149 = vector.shape_cast %148 : vector<1x2x128xf32> to vector<2x128xf32>
    %cst_20 = arith.constant dense<0.000000e+00> : vector<2x128xf32>
    %150 = tpu.matmul %147, %2, %cst_20 {dimension_numbers = #tpu.dot_dimension_numbers<[1], [0], [0], [1], [0, 0, 1, 1], [], []>} : vector<2x32xf32>, vector<32x128xf32>, vector<2x128xf32> -> vector<2x128xf32>
    %151 = arith.addf %149, %150 : vector<2x128xf32>
    %152 = math.tanh %151 : vector<2x128xf32>
    %153 = vector.broadcast %16 : vector<1x128xf32> to vector<2x128xf32>
    %154 = arith.mulf %152, %153 : vector<2x128xf32>
    %155 = vector.broadcast %19 : vector<1x128xf32> to vector<2x128xf32>
    %156 = arith.addf %154, %155 : vector<2x128xf32>
    %157 = vector.extract_strided_slice %156 {offsets = [0, 0], sizes = [2, 32], strides = [1, 1]} : vector<2x128xf32> to vector<2x32xf32>
    %158 = vector.extract_strided_slice %156 {offsets = [0, 32], sizes = [2, 32], strides = [1, 1]} : vector<2x128xf32> to vector<2x32xf32>
    %159 = vector.extract_strided_slice %156 {offsets = [0, 64], sizes = [2, 32], strides = [1, 1]} : vector<2x128xf32> to vector<2x32xf32>
    %160 = vector.extract_strided_slice %156 {offsets = [0, 96], sizes = [2, 32], strides = [1, 1]} : vector<2x128xf32> to vector<2x32xf32>
    %161 = arith.mulf %158, %145 : vector<2x32xf32>
    %162 = arith.mulf %157, %159 : vector<2x32xf32>
    %163 = arith.addf %161, %162 : vector<2x32xf32>
    %164 = math.tanh %163 : vector<2x32xf32>
    %165 = arith.mulf %160, %164 : vector<2x32xf32>
    %166 = tpu.concatenate %39, %57, %75, %93, %111, %129, %147, %165, %163 in 1 : vector<2x32xf32>, vector<2x32xf32>, vector<2x32xf32>, vector<2x32xf32>, vector<2x32xf32>, vector<2x32xf32>, vector<2x32xf32>, vector<2x32xf32>, vector<2x32xf32> -> vector<2x288xf32>
    %c0_21 = arith.constant 0 : index
    %c0_22 = arith.constant 0 : index
    %167 = vector.load %arg4[%c0_21, %c0_22] : memref<2x288xf32, #tpu.memory_space<vmem>>, vector<2x288xf32>
    tpu.vector_store %arg4[%c0_21, %c0_22], %166 {strides = array<i32>} : memref<2x288xf32, #tpu.memory_space<vmem>>, vector<2x288xf32>,
    return
  }
}

</mosaic_0001>

<llo_original>
// kernel: encoder_forward.1
$region0: #{encoder_forward.1}
  #allocation0 [shape = 'u32[]', space=smem, size = 0x4, offset = 0x4, fixed_abs, tag = 'smem constant byte address 0x4 - core index']
  #allocation1 [shape = 'u32[72,128]{1,0:T(1,128)}', space=vmem, size = 0x9000, scoped, tag = 'internal scratch']
  %s0 = inlined_call_operand.vmem [shape: f32[16,8], index: 0, kind: input, shape index: {}]
  %s1 = inlined_call_operand.hbm [shape: f32[8,128], index: 1, kind: input, shape index: {}]
  %s2 = inlined_call_operand.vmem [shape: f32[32,128], index: 2, kind: input, shape index: {}]
  %s3 = inlined_call_operand.vmem [shape: f32[1,128], index: 3, kind: input, shape index: {}]
  %s4 = inlined_call_operand.vmem [shape: f32[2,288], index: 4, kind: output, shape index: {}]
  %s5 = sld [smem:[#allocation0]]
  $region30: #{encoder_forward.1} parent=0
    _
  %s7 = ssub.s32 1, %s5
  %s8 = scalar_select 0, %s7, %s5
  $region1: #{encoder_forward.1} parent=0
    #allocation2 [shape = 'u8[4096]{0}', space=vmem, size = 0x1000, scoped, tag = 'input window, operand 1, single buffered']
    #allocation3 [shape = 's32[1]{0}', space=sflag, size = 0x4, scoped, tag = 'scoped memory for encoder_forward.1']
    %9 = vsyncpa [#allocation3], 0
    // Predicated region
    $region2: #{encoder_forward.1} parent=1 // pred_check
      _
    $region3: #{encoder_forward.1} parent=1 // pred_check_branch
      %11 = sbr.rel (0) target = $region5
    $region4: #{encoder_forward.1} parent=1 // pred_region
      _
    $region5: #{encoder_forward.1} parent=1 // pred_fallthru
      _
    // Predicated region
    $region6: #{encoder_forward.1} parent=1 // pred_check
      _
    $region7: #{encoder_forward.1} parent=1 // pred_check_branch
      %13 = sbr.rel (0) target = $region9
    $region8: #{encoder_forward.1} parent=1 // pred_region
      %15 = vsyncadd [#allocation3], 0
      %s17 = sshll.u32 %s1, 4
      %s18 = int_to_ptr.hbm [resolvable:$true] %s17
      %s19 = sshll.u32 [#allocation2], 4
      %s20 = int_to_ptr.vmem [resolvable:$true] %s19
      %22 = dma.hbm_to_vmem [thread:$0]  %s18, 128, %s20, [#allocation3]
    $region9: #{encoder_forward.1} parent=1 // pred_fallthru
      _
    // Predicated region
    $region10: #{encoder_forward.1} parent=1 // pred_check
      _
    $region11: #{encoder_forward.1} parent=1 // pred_check_branch
      %24 = sbr.rel (0) target = $region13
    $region12: #{encoder_forward.1} parent=1 // pred_region
      _
    $region13: #{encoder_forward.1} parent=1 // pred_fallthru
      _
    // Predicated region
    $region14: #{encoder_forward.1} parent=1 // pred_check
      _
    $region15: #{encoder_forward.1} parent=1 // pred_check_branch
      %26 = sbr.rel (0) target = $region17
    $region16: #{encoder_forward.1} parent=1 // pred_region
      _
    $region17: #{encoder_forward.1} parent=1 // pred_fallthru
      _
    // Predicated region
    $region18: #{encoder_forward.1} parent=1 // pred_check
      _
    $region19: #{encoder_forward.1} parent=1 // pred_check_branch
      %28 = sbr.rel (0) target = $region21
    $region20: #{encoder_forward.1} parent=1 // pred_region
      %30 = dma.done [#allocation3], 128
    $region21: #{encoder_forward.1} parent=1 // pred_fallthru
      _
    %v31 = vld [vmem:[%s0] sm:$0xff]
    %v32 = vld [vmem:[%s0 + $0x8] sm:$0xff]
    %v33 = vld [vmem:[#allocation2] sm:$0xff]
    %v34 = vld [vmem:[%s2] sm:$0xff]
    %v35 = vld [vmem:[%s2 + $0x8] sm:$0xff]
    %v36 = vld [vmem:[%s2 + $0x10] sm:$0xff]
    %v37 = vld [vmem:[%s2 + $0x18] sm:$0xff]
    %v38 = vld [vmem:[%s3] sm:$0x1]
    %v40 = vperm.slane %v38, 0
    %vm42 = vcmask 64512
    %v44 = vsel %vm42, %v31, 0
    %v47 = vsel %vm42, %v32, 0
    %49 = vmatpush.msra.mxu0 0.0
    %50 = vmatpush.msra.mxu0 0.0
    %51 = vmatpush.msra.mxu0 0.0
    %52 = vmatpush.msra.mxu0 0.0
    %53 = vmatpush.msra.mxu0 0.0
    %54 = vmatpush.msra.mxu0 0.0
    %55 = vmatpush.msra.mxu0 0.0
    %56 = vmatpush.msra.mxu0 0.0
    %57 = vmatpush.msra.mxu0 0.0
    %58 = vmatpush.msra.mxu0 0.0
    %59 = vmatpush.msra.mxu0 0.0
    %60 = vmatpush.msra.mxu0 0.0
    %61 = vmatpush.msra.mxu0 0.0
    %62 = vmatpush.msra.mxu0 0.0
    %63 = vmatpush.msra.mxu0 0.0
    %64 = vmatpush.msra.mxu0 %v33
    %65 = vmatmul.f32.gmra.mxu0 %v44
    %v66 = vpop.f32.mrf.mxu0
    %v67 = vadd.f32 %v40, %v66
    %68 = vmatmul.f32.gmra.mxu0 %v47
    %v69 = vpop.f32.mrf.mxu0
    %v70 = vadd.f32 %v40, %v69
    %71 = vdwg.mxu0
    %v74 = vrot.slane %v67, 2
    %v75 = vrot.slane %v67, 4
    %v76 = vrot.slane %v67, 6
    %v77 = vrot.slane %v70, 2
    %v78 = vrot.slane %v70, 4
    %v79 = vrot.slane %v70, 6
    %v86 = vlaneseq
    %v87 = vand.u32 %v86, 127
    %vm88 = vcmp.ge.s32.totalorder %v87, 64
    %vm89 = vcmp.lt.s32.totalorder %v87, 96
    %vm90 = vmand %vm88, %vm89
    %v91 = vsel %vm90, 1.0, 0.5
    %v92 = vsel %vm90, 0.0, 0.5
    %vm93 = vcmask 261120
    %v95 = vsel %vm93, 0.0, 0
    %97 = vmatpush.msra.mxu0 0.0
    %98 = vmatpush.msra.mxu0 0.0
    %99 = vmatpush.msra.mxu0 0.0
    %100 = vmatpush.msra.mxu0 0.0
    %101 = vmatpush.msra.mxu0 0.0
    %102 = vmatpush.msra.mxu0 0.0
    %103 = vmatpush.msra.mxu0 0.0
    %104 = vmatpush.msra.mxu0 0.0
    %105 = vmatpush.msra.mxu0 0.0
    %106 = vmatpush.msra.mxu0 0.0
    %107 = vmatpush.msra.mxu0 0.0
    %108 = vmatpush.msra.mxu0 0.0
    %109 = vmatpush.msra.mxu0 %v37
    %110 = vmatpush.msra.mxu0 %v36
    %111 = vmatpush.msra.mxu0 %v35
    %112 = vmatpush.msra.mxu0 %v34
    %113 = vmatmul.f32.gmra.mxu0 %v95
    %v114 = vpop.f32.mrf.mxu0
    %v115 = vadd.f32 0.0, %v114
    %116 = vdwg.mxu0
    %v117 = vadd.f32 %v67, %v115
    %v118 = vtanh.pop %v117
    %v119 = vmul.f32 %v118, %v91
    %v120 = vadd.f32 %v119, %v92
    %v121 = vmul.f32 %v120, 0.0
    %123 = vrot.lane.b32.xlu0 %v120, 64
    %v124 = vpop.permute.xlu0 %123
    %v126 = vmul.f32 %v120, %v124
    %128 = vrot.lane.b32.xlu0 %v126, 32
    %v129 = vpop.permute.xlu0 %128
    %v131 = vadd.f32 %v121, %v129
    %v132 = vtanh.pop %v131
    %134 = vrot.lane.b32.xlu0 %v132, 64
    %v135 = vpop.permute.xlu0 %134
    %v137 = vmul.f32 %v120, %v135
    %139 = vst [vmem:[#allocation1] ss:$4 sm:$0xff] %v137
    %v140 = vld.sshfl [vmem:[#allocation1] sm:$0xff pattern:$0x73625140]
    %141 = vrot.lane.b32.xlu0 %v140, 32
    %v142 = vpop.permute.xlu0 %141
    %v143 = vsel %vm93, %v142, 0
    %145 = vmatpush.msra.mxu0 0.0
    %146 = vmatpush.msra.mxu0 0.0
    %147 = vmatpush.msra.mxu0 0.0
    %148 = vmatpush.msra.mxu0 0.0
    %149 = vmatpush.msra.mxu0 0.0
    %150 = vmatpush.msra.mxu0 0.0
    %151 = vmatpush.msra.mxu0 0.0
    %152 = vmatpush.msra.mxu0 0.0
    %153 = vmatpush.msra.mxu0 0.0
    %154 = vmatpush.msra.mxu0 0.0
    %155 = vmatpush.msra.mxu0 0.0
    %156 = vmatpush.msra.mxu0 0.0
    %157 = vmatpush.msra.mxu0 %v37
    %158 = vmatpush.msra.mxu0 %v36
    %159 = vmatpush.msra.mxu0 %v35
    %160 = vmatpush.msra.mxu0 %v34
    %161 = vmatmul.f32.gmra.mxu0 %v143
    %v162 = vpop.f32.mrf.mxu0
    %v163 = vadd.f32 0.0, %v162
    %164 = vdwg.mxu0
    %v165 = vadd.f32 %v74, %v163
    %v166 = vtanh.pop %v165
    %v167 = vmul.f32 %v166, %v91
    %v168 = vadd.f32 %v167, %v92
    %v169 = vmul.f32 %v168, %v131
    %171 = vrot.lane.b32.xlu0 %v168, 64
    %v172 = vpop.permute.xlu0 %171
    %v174 = vmul.f32 %v168, %v172
    %176 = vrot.lane.b32.xlu0 %v174, 32
    %v177 = vpop.permute.xlu0 %176
    %v179 = vadd.f32 %v169, %v177
    %v180 = vtanh.pop %v179
    %182 = vrot.lane.b32.xlu0 %v180, 64
    %v183 = vpop.permute.xlu0 %182
    %v185 = vmul.f32 %v168, %v183
    %187 = vst [vmem:[#allocation1] ss:$4 sm:$0xff] %v185
    %v188 = vld.sshfl [vmem:[#allocation1] sm:$0xff pattern:$0x73625140]
    %189 = vrot.lane.b32.xlu0 %v188, 32
    %v190 = vpop.permute.xlu0 %189
    %v191 = vsel %vm93, %v190, 0
    %193 = vmatpush.msra.mxu0 0.0
    %194 = vmatpush.msra.mxu0 0.0
    %195 = vmatpush.msra.mxu0 0.0
    %196 = vmatpush.msra.mxu0 0.0
    %197 = vmatpush.msra.mxu0 0.0
    %198 = vmatpush.msra.mxu0 0.0
    %199 = vmatpush.msra.mxu0 0.0
    %200 = vmatpush.msra.mxu0 0.0
    %201 = vmatpush.msra.mxu0 0.0
    %202 = vmatpush.msra.mxu0 0.0
    %203 = vmatpush.msra.mxu0 0.0
    %204 = vmatpush.msra.mxu0 0.0
    %205 = vmatpush.msra.mxu0 %v37
    %206 = vmatpush.msra.mxu0 %v36
    %207 = vmatpush.msra.mxu0 %v35
    %208 = vmatpush.msra.mxu0 %v34
    %209 = vmatmul.f32.gmra.mxu0 %v191
    %v210 = vpop.f32.mrf.mxu0
    %v211 = vadd.f32 0.0, %v210
    %212 = vdwg.mxu0
    %v213 = vadd.f32 %v75, %v211
    %v214 = vtanh.pop %v213
    %v215 = vmul.f32 %v214, %v91
    %v216 = vadd.f32 %v215, %v92
    %v217 = vmul.f32 %v216, %v179
    %219 = vrot.lane.b32.xlu0 %v216, 64
    %v220 = vpop.permute.xlu0 %219
    %v222 = vmul.f32 %v216, %v220
    %224 = vrot.lane.b32.xlu0 %v222, 32
    %v225 = vpop.permute.xlu0 %224
    %v227 = vadd.f32 %v217, %v225
    %v228 = vtanh.pop %v227
    %230 = vrot.lane.b32.xlu0 %v228, 64
    %v231 = vpop.permute.xlu0 %230
    %v233 = vmul.f32 %v216, %v231
    %235 = vst [vmem:[#allocation1] ss:$4 sm:$0xff] %v233
    %v236 = vld.sshfl [vmem:[#allocation1] sm:$0xff pattern:$0x73625140]
    %237 = vrot.lane.b32.xlu0 %v236, 32
    %v238 = vpop.permute.xlu0 %237
    %v239 = vsel %vm93, %v238, 0
    %241 = vmatpush.msra.mxu0 0.0
    %242 = vmatpush.msra.mxu0 0.0
    %243 = vmatpush.msra.mxu0 0.0
    %244 = vmatpush.msra.mxu0 0.0
    %245 = vmatpush.msra.mxu0 0.0
    %246 = vmatpush.msra.mxu0 0.0
    %247 = vmatpush.msra.mxu0 0.0
    %248 = vmatpush.msra.mxu0 0.0
    %249 = vmatpush.msra.mxu0 0.0
    %250 = vmatpush.msra.mxu0 0.0
    %251 = vmatpush.msra.mxu0 0.0
    %252 = vmatpush.msra.mxu0 0.0
    %253 = vmatpush.msra.mxu0 %v37
    %254 = vmatpush.msra.mxu0 %v36
    %255 = vmatpush.msra.mxu0 %v35
    %256 = vmatpush.msra.mxu0 %v34
    %257 = vmatmul.f32.gmra.mxu0 %v239
    %v258 = vpop.f32.mrf.mxu0
    %v259 = vadd.f32 0.0, %v258
    %260 = vdwg.mxu0
    %v261 = vadd.f32 %v76, %v259
    %v262 = vtanh.pop %v261
    %v263 = vmul.f32 %v262, %v91
    %v264 = vadd.f32 %v263, %v92
    %v265 = vmul.f32 %v264, %v227
    %267 = vrot.lane.b32.xlu0 %v264, 64
    %v268 = vpop.permute.xlu0 %267
    %v270 = vmul.f32 %v264, %v268
    %272 = vrot.lane.b32.xlu0 %v270, 32
    %v273 = vpop.permute.xlu0 %272
    %v275 = vadd.f32 %v265, %v273
    %v276 = vtanh.pop %v275
    %278 = vrot.lane.b32.xlu0 %v276, 64
    %v279 = vpop.permute.xlu0 %278
    %v281 = vmul.f32 %v264, %v279
    %283 = vst [vmem:[#allocation1] ss:$4 sm:$0xff] %v281
    %v284 = vld.sshfl [vmem:[#allocation1] sm:$0xff pattern:$0x73625140]
    %285 = vrot.lane.b32.xlu0 %v284, 32
    %v286 = vpop.permute.xlu0 %285
    %v287 = vsel %vm93, %v286, 0
    %289 = vmatpush.msra.mxu0 0.0
    %290 = vmatpush.msra.mxu0 0.0
    %291 = vmatpush.msra.mxu0 0.0
    %292 = vmatpush.msra.mxu0 0.0
    %293 = vmatpush.msra.mxu0 0.0
    %294 = vmatpush.msra.mxu0 0.0
    %295 = vmatpush.msra.mxu0 0.0
    %296 = vmatpush.msra.mxu0 0.0
    %297 = vmatpush.msra.mxu0 0.0
    %298 = vmatpush.msra.mxu0 0.0
    %299 = vmatpush.msra.mxu0 0.0
    %300 = vmatpush.msra.mxu0 0.0
    %301 = vmatpush.msra.mxu0 %v37
    %302 = vmatpush.msra.mxu0 %v36
    %303 = vmatpush.msra.mxu0 %v35
    %304 = vmatpush.msra.mxu0 %v34
    %305 = vmatmul.f32.gmra.mxu0 %v287
    %v306 = vpop.f32.mrf.mxu0
    %v307 = vadd.f32 0.0, %v306
    %308 = vdwg.mxu0
    %v309 = vadd.f32 %v70, %v307
    %v310 = vtanh.pop %v309
    %v311 = vmul.f32 %v310, %v91
    %v312 = vadd.f32 %v311, %v92
    %v313 = vmul.f32 %v312, %v275
    %315 = vrot.lane.b32.xlu0 %v312, 64
    %v316 = vpop.permute.xlu0 %315
    %v318 = vmul.f32 %v312, %v316
    %320 = vrot.lane.b32.xlu0 %v318, 32
    %v321 = vpop.permute.xlu0 %320
    %v323 = vadd.f32 %v313, %v321
    %v324 = vtanh.pop %v323
    %326 = vrot.lane.b32.xlu0 %v324, 64
    %v327 = vpop.permute.xlu0 %326
    %v329 = vmul.f32 %v312, %v327
    %331 = vst [vmem:[#allocation1] ss:$4 sm:$0xff] %v329
    %v332 = vld.sshfl [vmem:[#allocation1] sm:$0xff pattern:$0x73625140]
    %333 = vrot.lane.b32.xlu0 %v332, 32
    %v334 = vpop.permute.xlu0 %333
    %v335 = vsel %vm93, %v334, 0
    %337 = vmatpush.msra.mxu0 0.0
    %338 = vmatpush.msra.mxu0 0.0
    %339 = vmatpush.msra.mxu0 0.0
    %340 = vmatpush.msra.mxu0 0.0
    %341 = vmatpush.msra.mxu0 0.0
    %342 = vmatpush.msra.mxu0 0.0
    %343 = vmatpush.msra.mxu0 0.0
    %344 = vmatpush.msra.mxu0 0.0
    %345 = vmatpush.msra.mxu0 0.0
    %346 = vmatpush.msra.mxu0 0.0
    %347 = vmatpush.msra.mxu0 0.0
    %348 = vmatpush.msra.mxu0 0.0
    %349 = vmatpush.msra.mxu0 %v37
    %350 = vmatpush.msra.mxu0 %v36
    %351 = vmatpush.msra.mxu0 %v35
    %352 = vmatpush.msra.mxu0 %v34
    %353 = vmatmul.f32.gmra.mxu0 %v335
    %v354 = vpop.f32.mrf.mxu0
    %v355 = vadd.f32 0.0, %v354
    %356 = vdwg.mxu0
    %v357 = vadd.f32 %v77, %v355
    %v358 = vtanh.pop %v357
    %v359 = vmul.f32 %v358, %v91
    %v360 = vadd.f32 %v359, %v92
    %v361 = vmul.f32 %v360, %v323
    %363 = vrot.lane.b32.xlu0 %v360, 64
    %v364 = vpop.permute.xlu0 %363
    %v366 = vmul.f32 %v360, %v364
    %368 = vrot.lane.b32.xlu0 %v366, 32
    %v369 = vpop.permute.xlu0 %368
    %v371 = vadd.f32 %v361, %v369
    %v372 = vtanh.pop %v371
    %374 = vrot.lane.b32.xlu0 %v372, 64
    %v375 = vpop.permute.xlu0 %374
    %v377 = vmul.f32 %v360, %v375
    %379 = vst [vmem:[#allocation1] ss:$4 sm:$0xff] %v377
    %v380 = vld.sshfl [vmem:[#allocation1] sm:$0xff pattern:$0x73625140]
    %381 = vrot.lane.b32.xlu0 %v380, 32
    %v382 = vpop.permute.xlu0 %381
    %v383 = vsel %vm93, %v382, 0
    %385 = vmatpush.msra.mxu0 0.0
    %386 = vmatpush.msra.mxu0 0.0
    %387 = vmatpush.msra.mxu0 0.0
    %388 = vmatpush.msra.mxu0 0.0
    %389 = vmatpush.msra.mxu0 0.0
    %390 = vmatpush.msra.mxu0 0.0
    %391 = vmatpush.msra.mxu0 0.0
    %392 = vmatpush.msra.mxu0 0.0
    %393 = vmatpush.msra.mxu0 0.0
    %394 = vmatpush.msra.mxu0 0.0
    %395 = vmatpush.msra.mxu0 0.0
    %396 = vmatpush.msra.mxu0 0.0
    %397 = vmatpush.msra.mxu0 %v37
    %398 = vmatpush.msra.mxu0 %v36
    %399 = vmatpush.msra.mxu0 %v35
    %400 = vmatpush.msra.mxu0 %v34
    %401 = vmatmul.f32.gmra.mxu0 %v383
    %v402 = vpop.f32.mrf.mxu0
    %v403 = vadd.f32 0.0, %v402
    %404 = vdwg.mxu0
    %v405 = vadd.f32 %v78, %v403
    %v406 = vtanh.pop %v405
    %v407 = vmul.f32 %v406, %v91
    %v408 = vadd.f32 %v407, %v92
    %v409 = vmul.f32 %v408, %v371
    %411 = vrot.lane.b32.xlu0 %v408, 64
    %v412 = vpop.permute.xlu0 %411
    %v414 = vmul.f32 %v408, %v412
    %416 = vrot.lane.b32.xlu0 %v414, 32
    %v417 = vpop.permute.xlu0 %416
    %v419 = vadd.f32 %v409, %v417
    %v420 = vtanh.pop %v419
    %422 = vrot.lane.b32.xlu0 %v420, 64
    %v423 = vpop.permute.xlu0 %422
    %v425 = vmul.f32 %v408, %v423
    %427 = vst [vmem:[#allocation1] ss:$4 sm:$0xff] %v425
    %v428 = vld.sshfl [vmem:[#allocation1] sm:$0xff pattern:$0x73625140]
    %429 = vrot.lane.b32.xlu0 %v428, 32
    %v430 = vpop.permute.xlu0 %429
    %v431 = vsel %vm93, %v430, 0
    %433 = vmatpush.msra.mxu0 0.0
    %434 = vmatpush.msra.mxu0 0.0
    %435 = vmatpush.msra.mxu0 0.0
    %436 = vmatpush.msra.mxu0 0.0
    %437 = vmatpush.msra.mxu0 0.0
    %438 = vmatpush.msra.mxu0 0.0
    %439 = vmatpush.msra.mxu0 0.0
    %440 = vmatpush.msra.mxu0 0.0
    %441 = vmatpush.msra.mxu0 0.0
    %442 = vmatpush.msra.mxu0 0.0
    %443 = vmatpush.msra.mxu0 0.0
    %444 = vmatpush.msra.mxu0 0.0
    %445 = vmatpush.msra.mxu0 %v37
    %446 = vmatpush.msra.mxu0 %v36
    %447 = vmatpush.msra.mxu0 %v35
    %448 = vmatpush.msra.mxu0 %v34
    %449 = vmatmul.f32.gmra.mxu0 %v431
    %v450 = vpop.f32.mrf.mxu0
    %v451 = vadd.f32 0.0, %v450
    %452 = vdwg.mxu0
    %v453 = vadd.f32 %v79, %v451
    %v454 = vtanh.pop %v453
    %v455 = vmul.f32 %v454, %v91
    %v456 = vadd.f32 %v455, %v92
    %v457 = vmul.f32 %v456, %v419
    %459 = vrot.lane.b32.xlu0 %v456, 64
    %v460 = vpop.permute.xlu0 %459
    %v462 = vmul.f32 %v456, %v460
    %464 = vrot.lane.b32.xlu0 %v462, 32
    %v465 = vpop.permute.xlu0 %464
    %v467 = vadd.f32 %v457, %v465
    %v468 = vtanh.pop %v467
    %470 = vrot.lane.b32.xlu0 %v468, 64
    %v471 = vpop.permute.xlu0 %470
    %v473 = vmul.f32 %v456, %v471
    %474 = vst [vmem:[#allocation1] ss:$4 sm:$0xff] %v137
    %v475 = vld.sshfl [vmem:[#allocation1] sm:$0xff pattern:$0x73625140]
    %476 = vrot.lane.b32.xlu0 %v475, 32
    %v477 = vpop.permute.xlu0 %476
    %479 = vst [vmem:[#allocation1] ss:$4 sm:$0xff] %v185
    %v480 = vld.sshfl [vmem:[#allocation1] sm:$0xff pattern:$0x73625140]
    %481 = vrot.lane.b32.xlu0 %v480, 64
    %v482 = vpop.permute.xlu0 %481
    %484 = vst [vmem:[#allocation1] ss:$4 sm:$0xff] %v233
    %v485 = vld.sshfl [vmem:[#allocation1] sm:$0xff pattern:$0x73625140]
    %486 = vrot.lane.b32.xlu0 %v485, 96
    %v487 = vpop.permute.xlu0 %486
    %489 = vst [vmem:[#allocation1] ss:$4 sm:$0xff] %v329
    %v490 = vld.sshfl [vmem:[#allocation1] sm:$0xff pattern:$0x73625140]
    %491 = vrot.lane.b32.xlu0 %v490, 32
    %v492 = vpop.permute.xlu0 %491
    %494 = vst [vmem:[#allocation1] ss:$4 sm:$0xff] %v377
    %v495 = vld.sshfl [vmem:[#allocation1] sm:$0xff pattern:$0x73625140]
    %496 = vrot.lane.b32.xlu0 %v495, 64
    %v497 = vpop.permute.xlu0 %496
    %499 = vst [vmem:[#allocation1] ss:$4 sm:$0xff] %v425
    %v500 = vld.sshfl [vmem:[#allocation1] sm:$0xff pattern:$0x73625140]
    %501 = vrot.lane.b32.xlu0 %v500, 96
    %v502 = vpop.permute.xlu0 %501
    %505 = vst [vmem:[#allocation1] ss:$4 sm:$0xff] %v467
    %v506 = vld.sshfl [vmem:[#allocation1] sm:$0xff pattern:$0x73625140]
    %507 = vrot.lane.b32.xlu0 %v506, 96
    %v508 = vpop.permute.xlu0 %507
    %v509 = vsel %vm93, %v477, %v482
    %vm510 = vcmask 523264
    %v511 = vsel %vm510, %v509, %v487
    %vm512 = vcmask 785408
    %v513 = vsel %vm512, %v511, %v281
    %v514 = vsel %vm93, %v492, %v497
    %v515 = vsel %vm510, %v514, %v502
    %v516 = vsel %vm512, %v515, %v473
    %v519 = vrot.slane %v516, 6
    %v520 = vrot.slane %v508, 4
    %vm521 = vcmask 1041408
    %v522 = vsel %vm521, %v513, %v519
    %vm523 = vcmask 1043456
    %v524 = vsel %vm523, %v522, %v520
    %vm526 = vcmask 1043458
    %vm527 = vmor %vm526, %vm521
    %vm528 = vcmask 259076
    %vm529 = vmor %vm528, %vm527
    %530 = vst.msk [vmem:[%s4] sm:$0x3f] %vm529, %v524
    // Predicated region
    $region22: #{encoder_forward.1} parent=1 // pred_check
      _
    $region23: #{encoder_forward.1} parent=1 // pred_check_branch
      %532 = sbr.rel (0) target = $region25
    $region24: #{encoder_forward.1} parent=1 // pred_region
      _
    $region25: #{encoder_forward.1} parent=1 // pred_fallthru
      _
    // Predicated region
    $region26: #{encoder_forward.1} parent=1 // pred_check
      _
    $region27: #{encoder_forward.1} parent=1 // pred_check_branch
      %534 = sbr.rel (0) target = $region29
    $region28: #{encoder_forward.1} parent=1 // pred_region
      _
    $region29: #{encoder_forward.1} parent=1 // pred_fallthru
      _
    %535 = vsyncpa [#allocation3], 1

</llo_original>
